<compile_context>
chip_gen: v5e
topology: v5e:2x2
jax: 0.10.0
libtpu: 0.0.40
codegen_flags: <defaults>
</compile_context>

<pallas_src>
import functools

import jax
import jax.numpy as jnp
from jax.experimental import pallas as pl
from jax.experimental.pallas import tpu as pltpu

SH_C0 = 0.28209479177387814
SH_C1 = 0.4886025119029199
SH_C2 = (1.0925484305920792, -1.0925484305920792, 0.31539156525252005,
         -1.0925484305920792, 0.5462742152960396)

LANES = 128      # vreg lane width: rows live on the lane axis
SUBLANES = 8     # f32 sublane tile


def _cdiv(a, b):
    return -(-a // b)


def _round_up(a, b):
    return _cdiv(a, b) * b


def _choose_tb(g, *, max_tb=256, min_steps=8):
    """Groups-of-128-rows per grid step: aim for >= min_steps steps, cap at max_tb."""
    tb = _round_up(_cdiv(g, min_steps), SUBLANES)
    return max(SUBLANES, min(tb, max_tb))


def choose_tiling(n_rows, *, max_tb=256, min_steps=8):
    """(tb, steps, padded_rows) for n_rows; padded_rows = steps * tb * 128."""
    g_raw = _cdiv(max(n_rows, 1), LANES)
    tb = _choose_tb(g_raw, max_tb=max_tb, min_steps=min_steps)
    steps = _cdiv(g_raw, tb)
    return tb, steps, steps * tb * LANES


def _tb_for_groups(g, *, max_tb=256, min_steps=8):
    """Largest multiple-of-8 divisor of g that respects the tiling targets."""
    cap = min(_choose_tb(g, max_tb=max_tb, min_steps=min_steps), g)
    cap -= cap % SUBLANES
    for tb in range(max(cap, SUBLANES), 0, -SUBLANES):
        if g % tb == 0:
            return tb
    return g  # only reachable for g < 8; never produced by sh_pack_coeffs


def sh_kernel(k_ref, d_ref, o_ref):
    """k_ref: (C*9, TB, 128)   d_ref: (3, TB, 128)   o_ref: (C, TB, 128)."""
    f32 = jnp.float32
    x = d_ref[0].astype(f32)
    y = d_ref[1].astype(f32)
    z = d_ref[2].astype(f32)

    xx = x * x
    yy = y * y
    zz = z * z

    # Degree-0..2 SH basis terms, shared across all colour channels.
    b1 = -SH_C1 * y
    b2 = SH_C1 * z
    b3 = -SH_C1 * x
    b4 = SH_C2[0] * (x * y)
    b5 = SH_C2[1] * (y * z)
    b6 = SH_C2[2] * (2.0 * zz - xx - yy)
    b7 = SH_C2[3] * (x * z)
    b8 = SH_C2[4] * (xx - yy)

    num_channels = o_ref.shape[0]
    for c in range(num_channels):          # static (C = 3): unrolled at trace time
        base = 9 * c
        acc = SH_C0 * k_ref[base + 0].astype(f32)
        acc = acc + b1 * k_ref[base + 1].astype(f32)
        acc = acc + b2 * k_ref[base + 2].astype(f32)
        acc = acc + b3 * k_ref[base + 3].astype(f32)
        acc = acc + b4 * k_ref[base + 4].astype(f32)
        acc = acc + b5 * k_ref[base + 5].astype(f32)
        acc = acc + b6 * k_ref[base + 6].astype(f32)
        acc = acc + b7 * k_ref[base + 7].astype(f32)
        acc = acc + b8 * k_ref[base + 8].astype(f32)
        o_ref[c] = acc.astype(o_ref.dtype)


def sh_pack_coeffs(k, *, max_tb=256, min_steps=8, coeff_dtype=jnp.float32):
    """One-time AoS -> SoA repack of the SH coefficients (hoisted out of the hot loop).

    k: [N, C, 9]  ->  [C*9, G, 128] with rows on the lane axis, zero-padded up to
    a multiple of (tb * 128).  `coeff_dtype=jnp.bfloat16` halves coefficient HBM
    traffic (~40% of total) at a small numerical cost; accumulation stays f32.
    """
    n, c, s = k.shape
    assert s == 9, "expected degree-2 SH coefficients (9 per channel)"
    _, _, np_rows = choose_tiling(n, max_tb=max_tb, min_steps=min_steps)
    g = np_rows // LANES
    k2 = k.reshape(n, c * s).astype(coeff_dtype).T          # (C*9, N)
    k2 = jnp.pad(k2, ((0, 0), (0, np_rows - n)))            # padding folded into the copy
    return k2.reshape(c * s, g, LANES)


@functools.partial(
    jax.jit,
    static_argnames=("num_rows", "channel_major_out", "max_tb", "min_steps"))
def sh_forward_packed(k_packed, d, *, num_rows=None, channel_major_out=False,
                      max_tb=256, min_steps=8):
    """Hot path: packed coefficients + per-call view directions -> colours.

    k_packed : [C*9, G, 128] from sh_pack_coeffs (f32 or bf16)
    d        : [N, 3] view directions, N <= G * 128
    returns  : [N, C] float32 (or [C, N] if channel_major_out=True, which skips
               the final transpose copy).
    """
    cs, g, lanes = k_packed.shape
    assert lanes == LANES and cs % 9 == 0
    c = cs // 9
    assert d.ndim == 2 and d.shape[1] == 3
    n = d.shape[0] if num_rows is None else num_rows
    np_rows = g * LANES
    assert n <= np_rows and d.shape[0] <= np_rows

    # Per-call layout plumbing for d only (12 B/row): pad + SoA in a single copy.
    d2 = jnp.pad(d.T.astype(jnp.float32), ((0, 0), (0, np_rows - d.shape[0])))
    d2 = d2.reshape(3, g, LANES)

    tb = _tb_for_groups(g, max_tb=max_tb, min_steps=min_steps)
    steps = g // tb

    k_itemsize = jnp.dtype(k_packed.dtype).itemsize
    cost = pl.CostEstimate(
        flops=(19 + 17 * c) * np_rows,
        transcendentals=0,
        bytes_accessed=(cs * k_itemsize + (3 + c) * 4) * np_rows,
    )

    out3 = pl.pallas_call(
        sh_kernel,
        out_shape=jax.ShapeDtypeStruct((c, g, LANES), jnp.float32),
        grid_spec=pltpu.PrefetchScalarGridSpec(
            num_scalar_prefetch=0,
            grid=(steps,),
            in_specs=[
                pl.BlockSpec((cs, tb, LANES), lambda i: (0, i, 0)),
                pl.BlockSpec((3, tb, LANES), lambda i: (0, i, 0)),
            ],
            out_specs=pl.BlockSpec((c, tb, LANES), lambda i: (0, i, 0)),
        ),
        compiler_params=pltpu.CompilerParams(
            dimension_semantics=("parallel",),
        ),
        cost_estimate=cost,
    )(k_packed, d2)

    out_cm = out3.reshape(c, np_rows)[:, :n]     # channel-major [C, N]
    if channel_major_out:
        return out_cm
    return out_cm.T                              # [N, C], matches the PyTorch module


def sh_forward(k, d, *, max_tb=256, min_steps=8, coeff_dtype=jnp.float32):
    """Drop-in equivalent of the PyTorch module: k [N,C,9], d [N,3] -> [N,C].

    Repacks k on every call; in a hot loop where k is reused (3DGS-style), call
    sh_pack_coeffs once and sh_forward_packed per call instead.
    """
    k_packed = sh_pack_coeffs(k, max_tb=max_tb, min_steps=min_steps,
                              coeff_dtype=coeff_dtype)
    return sh_forward_packed(k_packed, d, num_rows=k.shape[0],
                             max_tb=max_tb, min_steps=min_steps)


def sh_reference(k, d):
    """Pure-JAX mirror of the PyTorch forward."""
    x, y, z = d[..., 0:1], d[..., 1:2], d[..., 2:3]
    return (SH_C0 * k[..., 0]
            - SH_C1 * y * k[..., 1]
            + SH_C1 * z * k[..., 2]
            - SH_C1 * x * k[..., 3]
            + SH_C2[0] * x * y * k[..., 4]
            + SH_C2[1] * y * z * k[..., 5]
            + SH_C2[2] * (2.0 * z * z - x * x - y * y) * k[..., 6]
            + SH_C2[3] * x * z * k[..., 7]
            + SH_C2[4] * (x * x - y * y) * k[..., 8])


if __name__ == "__main__":
    key = jax.random.PRNGKey(0)
    kk, kd = jax.random.split(key)

    N, C = 2000, 3                                   # not a multiple of 128: ragged tail
    k = jax.random.normal(kk, (N, C, 9), jnp.float32)
    d = jax.random.normal(kd, (N, 3), jnp.float32)
    d = d / jnp.linalg.norm(d, axis=-1, keepdims=True)

    ref = sh_reference(k, d)

    # Hot-path usage: pack the frame-invariant coefficients once, then stream d.
    k_packed = sh_pack_coeffs(k)                     # (27, 16, 128), 2-step grid
    out = sh_forward_packed(k_packed, d)
    jax.block_until_ready(out)
    assert out.shape == (N, C)
    assert jnp.allclose(out, ref, atol=1e-4, rtol=1e-4)

    # Drop-in module-equivalent convenience call.
    out2 = sh_forward(k, d)
    jax.block_until_ready(out2)
    assert jnp.allclose(out2, ref, atol=1e-4, rtol=1e-4)

    # Optional reduced-precision coefficient streaming (~40% less HBM traffic).
    k_bf16 = sh_pack_coeffs(k, coeff_dtype=jnp.bfloat16)
    out_bf = sh_forward_packed(k_bf16, d)
    jax.block_until_ready(out_bf)
    assert jnp.allclose(out_bf, ref, atol=5e-2, rtol=5e-2)

    print("KERNEL_OK")
</pallas_src>

<mosaic_0001>
module attributes {stable_mosaic.version = 11 : i64} {
  func.func @sh_kernel(%arg0: i32, %arg1: memref<27x8x128xf32, #tpu.memory_space<vmem>>, %arg2: memref<3x8x128xf32, #tpu.memory_space<vmem>>, %arg3: memref<3x8x128xf32, #tpu.memory_space<vmem>>) attributes {dimension_semantics = [#tpu.dimension_semantics<parallel>], iteration_bounds = array<i64: 2>, scalar_prefetch = 0 : i64, scratch_operands = 0 : i64, tpu.core_type = #tpu.core_type<tc>, window_params = [{transform_indices = @transform_0, window_bounds = array<i64: 27, 8, 128>}, {transform_indices = @transform_1, window_bounds = array<i64: 3, 8, 128>}, {transform_indices = @transform_2, window_bounds = array<i64: 3, 8, 128>}]} {
    %c0 = arith.constant 0 : index
    %c0_0 = arith.constant 0 : index
    %c0_1 = arith.constant 0 : index
    %0 = vector.load %arg2[%c0, %c0_0, %c0_1] : memref<3x8x128xf32, #tpu.memory_space<vmem>>, vector<1x8x128xf32>
    %1 = vector.shape_cast %0 : vector<1x8x128xf32> to vector<8x128xf32>
    %c1 = arith.constant 1 : index
    %c0_2 = arith.constant 0 : index
    %c0_3 = arith.constant 0 : index
    %2 = vector.load %arg2[%c1, %c0_2, %c0_3] : memref<3x8x128xf32, #tpu.memory_space<vmem>>, vector<1x8x128xf32>
    %3 = vector.shape_cast %2 : vector<1x8x128xf32> to vector<8x128xf32>
    %c2 = arith.constant 2 : index
    %c0_4 = arith.constant 0 : index
    %c0_5 = arith.constant 0 : index
    %4 = vector.load %arg2[%c2, %c0_4, %c0_5] : memref<3x8x128xf32, #tpu.memory_space<vmem>>, vector<1x8x128xf32>
    %5 = vector.shape_cast %4 : vector<1x8x128xf32> to vector<8x128xf32>
    %6 = arith.mulf %1, %1 : vector<8x128xf32>
    %7 = arith.mulf %3, %3 : vector<8x128xf32>
    %8 = arith.mulf %5, %5 : vector<8x128xf32>
    %cst = arith.constant -0.488602519 : f32
    %9 = vector.broadcast %cst : f32 to vector<8x128xf32>
    %10 = arith.mulf %9, %3 : vector<8x128xf32>
    %cst_6 = arith.constant 0.488602519 : f32
    %11 = vector.broadcast %cst_6 : f32 to vector<8x128xf32>
    %12 = arith.mulf %11, %5 : vector<8x128xf32>
    %cst_7 = arith.constant -0.488602519 : f32
    %13 = vector.broadcast %cst_7 : f32 to vector<8x128xf32>
    %14 = arith.mulf %13, %1 : vector<8x128xf32>
    %15 = arith.mulf %1, %3 : vector<8x128xf32>
    %cst_8 = arith.constant 1.09254849 : f32
    %16 = vector.broadcast %cst_8 : f32 to vector<8x128xf32>
    %17 = arith.mulf %16, %15 : vector<8x128xf32>
    %18 = arith.mulf %3, %5 : vector<8x128xf32>
    %cst_9 = arith.constant -1.09254849 : f32
    %19 = vector.broadcast %cst_9 : f32 to vector<8x128xf32>
    %20 = arith.mulf %19, %18 : vector<8x128xf32>
    %cst_10 = arith.constant 2.000000e+00 : f32
    %21 = vector.broadcast %cst_10 : f32 to vector<8x128xf32>
    %22 = arith.mulf %21, %8 : vector<8x128xf32>
    %23 = arith.subf %22, %6 : vector<8x128xf32>
    %24 = arith.subf %23, %7 : vector<8x128xf32>
    %cst_11 = arith.constant 0.31539157 : f32
    %25 = vector.broadcast %cst_11 : f32 to vector<8x128xf32>
    %26 = arith.mulf %25, %24 : vector<8x128xf32>
    %27 = arith.mulf %1, %5 : vector<8x128xf32>
    %cst_12 = arith.constant -1.09254849 : f32
    %28 = vector.broadcast %cst_12 : f32 to vector<8x128xf32>
    %29 = arith.mulf %28, %27 : vector<8x128xf32>
    %30 = arith.subf %6, %7 : vector<8x128xf32>
    %cst_13 = arith.constant 0.546274245 : f32
    %31 = vector.broadcast %cst_13 : f32 to vector<8x128xf32>
    %32 = arith.mulf %31, %30 : vector<8x128xf32>
    %c0_14 = arith.constant 0 : index
    %c0_15 = arith.constant 0 : index
    %c0_16 = arith.constant 0 : index
    %33 = vector.load %arg1[%c0_14, %c0_15, %c0_16] : memref<27x8x128xf32, #tpu.memory_space<vmem>>, vector<1x8x128xf32>
    %34 = vector.shape_cast %33 : vector<1x8x128xf32> to vector<8x128xf32>
    %cst_17 = arith.constant 0.282094806 : f32
    %35 = vector.broadcast %cst_17 : f32 to vector<8x128xf32>
    %36 = arith.mulf %35, %34 : vector<8x128xf32>
    %c1_18 = arith.constant 1 : index
    %c0_19 = arith.constant 0 : index
    %c0_20 = arith.constant 0 : index
    %37 = vector.load %arg1[%c1_18, %c0_19, %c0_20] : memref<27x8x128xf32, #tpu.memory_space<vmem>>, vector<1x8x128xf32>
    %38 = vector.shape_cast %37 : vector<1x8x128xf32> to vector<8x128xf32>
    %39 = arith.mulf %10, %38 : vector<8x128xf32>
    %40 = arith.addf %36, %39 : vector<8x128xf32>
    %c2_21 = arith.constant 2 : index
    %c0_22 = arith.constant 0 : index
    %c0_23 = arith.constant 0 : index
    %41 = vector.load %arg1[%c2_21, %c0_22, %c0_23] : memref<27x8x128xf32, #tpu.memory_space<vmem>>, vector<1x8x128xf32>
    %42 = vector.shape_cast %41 : vector<1x8x128xf32> to vector<8x128xf32>
    %43 = arith.mulf %12, %42 : vector<8x128xf32>
    %44 = arith.addf %40, %43 : vector<8x128xf32>
    %c3 = arith.constant 3 : index
    %c0_24 = arith.constant 0 : index
    %c0_25 = arith.constant 0 : index
    %45 = vector.load %arg1[%c3, %c0_24, %c0_25] : memref<27x8x128xf32, #tpu.memory_space<vmem>>, vector<1x8x128xf32>
    %46 = vector.shape_cast %45 : vector<1x8x128xf32> to vector<8x128xf32>
    %47 = arith.mulf %14, %46 : vector<8x128xf32>
    %48 = arith.addf %44, %47 : vector<8x128xf32>
    %c4 = arith.constant 4 : index
    %c0_26 = arith.constant 0 : index
    %c0_27 = arith.constant 0 : index
    %49 = vector.load %arg1[%c4, %c0_26, %c0_27] : memref<27x8x128xf32, #tpu.memory_space<vmem>>, vector<1x8x128xf32>
    %50 = vector.shape_cast %49 : vector<1x8x128xf32> to vector<8x128xf32>
    %51 = arith.mulf %17, %50 : vector<8x128xf32>
    %52 = arith.addf %48, %51 : vector<8x128xf32>
    %c5 = arith.constant 5 : index
    %c0_28 = arith.constant 0 : index
    %c0_29 = arith.constant 0 : index
    %53 = vector.load %arg1[%c5, %c0_28, %c0_29] : memref<27x8x128xf32, #tpu.memory_space<vmem>>, vector<1x8x128xf32>
    %54 = vector.shape_cast %53 : vector<1x8x128xf32> to vector<8x128xf32>
    %55 = arith.mulf %20, %54 : vector<8x128xf32>
    %56 = arith.addf %52, %55 : vector<8x128xf32>
    %c6 = arith.constant 6 : index
    %c0_30 = arith.constant 0 : index
    %c0_31 = arith.constant 0 : index
    %57 = vector.load %arg1[%c6, %c0_30, %c0_31] : memref<27x8x128xf32, #tpu.memory_space<vmem>>, vector<1x8x128xf32>
    %58 = vector.shape_cast %57 : vector<1x8x128xf32> to vector<8x128xf32>
    %59 = arith.mulf %26, %58 : vector<8x128xf32>
    %60 = arith.addf %56, %59 : vector<8x128xf32>
    %c7 = arith.constant 7 : index
    %c0_32 = arith.constant 0 : index
    %c0_33 = arith.constant 0 : index
    %61 = vector.load %arg1[%c7, %c0_32, %c0_33] : memref<27x8x128xf32, #tpu.memory_space<vmem>>, vector<1x8x128xf32>
    %62 = vector.shape_cast %61 : vector<1x8x128xf32> to vector<8x128xf32>
    %63 = arith.mulf %29, %62 : vector<8x128xf32>
    %64 = arith.addf %60, %63 : vector<8x128xf32>
    %c8 = arith.constant 8 : index
    %c0_34 = arith.constant 0 : index
    %c0_35 = arith.constant 0 : index
    %65 = vector.load %arg1[%c8, %c0_34, %c0_35] : memref<27x8x128xf32, #tpu.memory_space<vmem>>, vector<1x8x128xf32>
    %66 = vector.shape_cast %65 : vector<1x8x128xf32> to vector<8x128xf32>
    %67 = arith.mulf %32, %66 : vector<8x128xf32>
    %68 = arith.addf %64, %67 : vector<8x128xf32>
    %c0_36 = arith.constant 0 : index
    %c0_37 = arith.constant 0 : index
    %c0_38 = arith.constant 0 : index
    %69 = vector.load %arg3[%c0_36, %c0_37, %c0_38] : memref<3x8x128xf32, #tpu.memory_space<vmem>>, vector<1x8x128xf32>
    %70 = vector.shape_cast %69 : vector<1x8x128xf32> to vector<8x128xf32>
    %71 = vector.shape_cast %68 : vector<8x128xf32> to vector<1x8x128xf32>
    tpu.vector_store %arg3[%c0_36, %c0_37, %c0_38], %71 {strides = array<i32>} : memref<3x8x128xf32, #tpu.memory_space<vmem>>, vector<1x8x128xf32>,
    %c9 = arith.constant 9 : index
    %c0_39 = arith.constant 0 : index
    %c0_40 = arith.constant 0 : index
    %72 = vector.load %arg1[%c9, %c0_39, %c0_40] : memref<27x8x128xf32, #tpu.memory_space<vmem>>, vector<1x8x128xf32>
    %73 = vector.shape_cast %72 : vector<1x8x128xf32> to vector<8x128xf32>
    %cst_41 = arith.constant 0.282094806 : f32
    %74 = vector.broadcast %cst_41 : f32 to vector<8x128xf32>
    %75 = arith.mulf %74, %73 : vector<8x128xf32>
    %c10 = arith.constant 10 : index
    %c0_42 = arith.constant 0 : index
    %c0_43 = arith.constant 0 : index
    %76 = vector.load %arg1[%c10, %c0_42, %c0_43] : memref<27x8x128xf32, #tpu.memory_space<vmem>>, vector<1x8x128xf32>
    %77 = vector.shape_cast %76 : vector<1x8x128xf32> to vector<8x128xf32>
    %78 = arith.mulf %10, %77 : vector<8x128xf32>
    %79 = arith.addf %75, %78 : vector<8x128xf32>
    %c11 = arith.constant 11 : index
    %c0_44 = arith.constant 0 : index
    %c0_45 = arith.constant 0 : index
    %80 = vector.load %arg1[%c11, %c0_44, %c0_45] : memref<27x8x128xf32, #tpu.memory_space<vmem>>, vector<1x8x128xf32>
    %81 = vector.shape_cast %80 : vector<1x8x128xf32> to vector<8x128xf32>
    %82 = arith.mulf %12, %81 : vector<8x128xf32>
    %83 = arith.addf %79, %82 : vector<8x128xf32>
    %c12 = arith.constant 12 : index
    %c0_46 = arith.constant 0 : index
    %c0_47 = arith.constant 0 : index
    %84 = vector.load %arg1[%c12, %c0_46, %c0_47] : memref<27x8x128xf32, #tpu.memory_space<vmem>>, vector<1x8x128xf32>
    %85 = vector.shape_cast %84 : vector<1x8x128xf32> to vector<8x128xf32>
    %86 = arith.mulf %14, %85 : vector<8x128xf32>
    %87 = arith.addf %83, %86 : vector<8x128xf32>
    %c13 = arith.constant 13 : index
    %c0_48 = arith.constant 0 : index
    %c0_49 = arith.constant 0 : index
    %88 = vector.load %arg1[%c13, %c0_48, %c0_49] : memref<27x8x128xf32, #tpu.memory_space<vmem>>, vector<1x8x128xf32>
    %89 = vector.shape_cast %88 : vector<1x8x128xf32> to vector<8x128xf32>
    %90 = arith.mulf %17, %89 : vector<8x128xf32>
    %91 = arith.addf %87, %90 : vector<8x128xf32>
    %c14 = arith.constant 14 : index
    %c0_50 = arith.constant 0 : index
    %c0_51 = arith.constant 0 : index
    %92 = vector.load %arg1[%c14, %c0_50, %c0_51] : memref<27x8x128xf32, #tpu.memory_space<vmem>>, vector<1x8x128xf32>
    %93 = vector.shape_cast %92 : vector<1x8x128xf32> to vector<8x128xf32>
    %94 = arith.mulf %20, %93 : vector<8x128xf32>
    %95 = arith.addf %91, %94 : vector<8x128xf32>
    %c15 = arith.constant 15 : index
    %c0_52 = arith.constant 0 : index
    %c0_53 = arith.constant 0 : index
    %96 = vector.load %arg1[%c15, %c0_52, %c0_53] : memref<27x8x128xf32, #tpu.memory_space<vmem>>, vector<1x8x128xf32>
    %97 = vector.shape_cast %96 : vector<1x8x128xf32> to vector<8x128xf32>
    %98 = arith.mulf %26, %97 : vector<8x128xf32>
    %99 = arith.addf %95, %98 : vector<8x128xf32>
    %c16 = arith.constant 16 : index
    %c0_54 = arith.constant 0 : index
    %c0_55 = arith.constant 0 : index
    %100 = vector.load %arg1[%c16, %c0_54, %c0_55] : memref<27x8x128xf32, #tpu.memory_space<vmem>>, vector<1x8x128xf32>
    %101 = vector.shape_cast %100 : vector<1x8x128xf32> to vector<8x128xf32>
    %102 = arith.mulf %29, %101 : vector<8x128xf32>
    %103 = arith.addf %99, %102 : vector<8x128xf32>
    %c17 = arith.constant 17 : index
    %c0_56 = arith.constant 0 : index
    %c0_57 = arith.constant 0 : index
    %104 = vector.load %arg1[%c17, %c0_56, %c0_57] : memref<27x8x128xf32, #tpu.memory_space<vmem>>, vector<1x8x128xf32>
    %105 = vector.shape_cast %104 : vector<1x8x128xf32> to vector<8x128xf32>
    %106 = arith.mulf %32, %105 : vector<8x128xf32>
    %107 = arith.addf %103, %106 : vector<8x128xf32>
    %c1_58 = arith.constant 1 : index
    %c0_59 = arith.constant 0 : index
    %c0_60 = arith.constant 0 : index
    %108 = vector.load %arg3[%c1_58, %c0_59, %c0_60] : memref<3x8x128xf32, #tpu.memory_space<vmem>>, vector<1x8x128xf32>
    %109 = vector.shape_cast %108 : vector<1x8x128xf32> to vector<8x128xf32>
    %110 = vector.shape_cast %107 : vector<8x128xf32> to vector<1x8x128xf32>
    tpu.vector_store %arg3[%c1_58, %c0_59, %c0_60], %110 {strides = array<i32>} : memref<3x8x128xf32, #tpu.memory_space<vmem>>, vector<1x8x128xf32>,
    %c18 = arith.constant 18 : index
    %c0_61 = arith.constant 0 : index
    %c0_62 = arith.constant 0 : index
    %111 = vector.load %arg1[%c18, %c0_61, %c0_62] : memref<27x8x128xf32, #tpu.memory_space<vmem>>, vector<1x8x128xf32>
    %112 = vector.shape_cast %111 : vector<1x8x128xf32> to vector<8x128xf32>
    %cst_63 = arith.constant 0.282094806 : f32
    %113 = vector.broadcast %cst_63 : f32 to vector<8x128xf32>
    %114 = arith.mulf %113, %112 : vector<8x128xf32>
    %c19 = arith.constant 19 : index
    %c0_64 = arith.constant 0 : index
    %c0_65 = arith.constant 0 : index
    %115 = vector.load %arg1[%c19, %c0_64, %c0_65] : memref<27x8x128xf32, #tpu.memory_space<vmem>>, vector<1x8x128xf32>
    %116 = vector.shape_cast %115 : vector<1x8x128xf32> to vector<8x128xf32>
    %117 = arith.mulf %10, %116 : vector<8x128xf32>
    %118 = arith.addf %114, %117 : vector<8x128xf32>
    %c20 = arith.constant 20 : index
    %c0_66 = arith.constant 0 : index
    %c0_67 = arith.constant 0 : index
    %119 = vector.load %arg1[%c20, %c0_66, %c0_67] : memref<27x8x128xf32, #tpu.memory_space<vmem>>, vector<1x8x128xf32>
    %120 = vector.shape_cast %119 : vector<1x8x128xf32> to vector<8x128xf32>
    %121 = arith.mulf %12, %120 : vector<8x128xf32>
    %122 = arith.addf %118, %121 : vector<8x128xf32>
    %c21 = arith.constant 21 : index
    %c0_68 = arith.constant 0 : index
    %c0_69 = arith.constant 0 : index
    %123 = vector.load %arg1[%c21, %c0_68, %c0_69] : memref<27x8x128xf32, #tpu.memory_space<vmem>>, vector<1x8x128xf32>
    %124 = vector.shape_cast %123 : vector<1x8x128xf32> to vector<8x128xf32>
    %125 = arith.mulf %14, %124 : vector<8x128xf32>
    %126 = arith.addf %122, %125 : vector<8x128xf32>
    %c22 = arith.constant 22 : index
    %c0_70 = arith.constant 0 : index
    %c0_71 = arith.constant 0 : index
    %127 = vector.load %arg1[%c22, %c0_70, %c0_71] : memref<27x8x128xf32, #tpu.memory_space<vmem>>, vector<1x8x128xf32>
    %128 = vector.shape_cast %127 : vector<1x8x128xf32> to vector<8x128xf32>
    %129 = arith.mulf %17, %128 : vector<8x128xf32>
    %130 = arith.addf %126, %129 : vector<8x128xf32>
    %c23 = arith.constant 23 : index
    %c0_72 = arith.constant 0 : index
    %c0_73 = arith.constant 0 : index
    %131 = vector.load %arg1[%c23, %c0_72, %c0_73] : memref<27x8x128xf32, #tpu.memory_space<vmem>>, vector<1x8x128xf32>
    %132 = vector.shape_cast %131 : vector<1x8x128xf32> to vector<8x128xf32>
    %133 = arith.mulf %20, %132 : vector<8x128xf32>
    %134 = arith.addf %130, %133 : vector<8x128xf32>
    %c24 = arith.constant 24 : index
    %c0_74 = arith.constant 0 : index
    %c0_75 = arith.constant 0 : index
    %135 = vector.load %arg1[%c24, %c0_74, %c0_75] : memref<27x8x128xf32, #tpu.memory_space<vmem>>, vector<1x8x128xf32>
    %136 = vector.shape_cast %135 : vector<1x8x128xf32> to vector<8x128xf32>
    %137 = arith.mulf %26, %136 : vector<8x128xf32>
    %138 = arith.addf %134, %137 : vector<8x128xf32>
    %c25 = arith.constant 25 : index
    %c0_76 = arith.constant 0 : index
    %c0_77 = arith.constant 0 : index
    %139 = vector.load %arg1[%c25, %c0_76, %c0_77] : memref<27x8x128xf32, #tpu.memory_space<vmem>>, vector<1x8x128xf32>
    %140 = vector.shape_cast %139 : vector<1x8x128xf32> to vector<8x128xf32>
    %141 = arith.mulf %29, %140 : vector<8x128xf32>
    %142 = arith.addf %138, %141 : vector<8x128xf32>
    %c26 = arith.constant 26 : index
    %c0_78 = arith.constant 0 : index
    %c0_79 = arith.constant 0 : index
    %143 = vector.load %arg1[%c26, %c0_78, %c0_79] : memref<27x8x128xf32, #tpu.memory_space<vmem>>, vector<1x8x128xf32>
    %144 = vector.shape_cast %143 : vector<1x8x128xf32> to vector<8x128xf32>
    %145 = arith.mulf %32, %144 : vector<8x128xf32>
    %146 = arith.addf %142, %145 : vector<8x128xf32>
    %c2_80 = arith.constant 2 : index
    %c0_81 = arith.constant 0 : index
    %c0_82 = arith.constant 0 : index
    %147 = vector.load %arg3[%c2_80, %c0_81, %c0_82] : memref<3x8x128xf32, #tpu.memory_space<vmem>>, vector<1x8x128xf32>
    %148 = vector.shape_cast %147 : vector<1x8x128xf32> to vector<8x128xf32>
    %149 = vector.shape_cast %146 : vector<8x128xf32> to vector<1x8x128xf32>
    tpu.vector_store %arg3[%c2_80, %c0_81, %c0_82], %149 {strides = array<i32>} : memref<3x8x128xf32, #tpu.memory_space<vmem>>, vector<1x8x128xf32>,
    return
  }
  func.func @transform_0(%arg0: i32) -> (i32, i32, i32) {
    %c0_i32 = arith.constant 0 : i32
    %c0_i32_0 = arith.constant 0 : i32
    %c0_i32_1 = arith.constant 0 : i32
    return %c0_i32, %arg0, %c0_i32_0 : i32, i32, i32
  }
  func.func @transform_1(%arg0: i32) -> (i32, i32, i32) {
    %c0_i32 = arith.constant 0 : i32
    %c0_i32_0 = arith.constant 0 : i32
    %c0_i32_1 = arith.constant 0 : i32
    return %c0_i32, %arg0, %c0_i32_0 : i32, i32, i32
  }
  func.func @transform_2(%arg0: i32) -> (i32, i32, i32) {
    %c0_i32 = arith.constant 0 : i32
    %c0_i32_0 = arith.constant 0 : i32
    %c0_i32_1 = arith.constant 0 : i32
    return %c0_i32, %arg0, %c0_i32_0 : i32, i32, i32
  }
}

</mosaic_0001>

<llo_original>
// kernel: sh_forward_packed.1
$region0: #{sh_forward_packed.1}
  #allocation0 [shape = 'u32[]', space=smem, size = 0x4, offset = 0x4, fixed_abs, tag = 'smem constant byte address 0x4 - core index']
  #allocation1 [shape = 'u32[72,128]{1,0:T(1,128)}', space=vmem, size = 0x9000, scoped, tag = 'internal scratch']
  %s0 = inlined_call_operand.hbm [shape: f32[27,16,128], index: 0, kind: input, shape index: {}]
  %s1 = inlined_call_operand.vmem [shape: f32[3,16,128], index: 1, kind: input, shape index: {}]
  %s2 = inlined_call_operand.vmem [shape: f32[3,16,128], index: 2, kind: output, shape index: {}]
  %s3 = sld [smem:[#allocation0]]
  $region117: #{sh_forward_packed.1} parent=0
    _
  %s5 = ssub.s32 1, %s3
  %s6 = scalar_select 0, %s5, %s3
  $region1: #{sh_forward_packed.1} parent=0
    #allocation2 [shape = 'u8[221184]{0}', space=vmem, size = 0x36000, scoped, tag = 'input window, operand 0']
    #allocation3 [shape = 's32[2]{0}', space=sflag, size = 0x8, scoped, tag = 'scoped memory for sh_forward_packed.1']
    #allocation4 [shape = 'u8[24576]{0}', space=vmem, size = 0x6000, scoped, tag = 'input window, operand 1']
    #allocation5 [shape = 'u8[24576]{0}', space=vmem, size = 0x6000, scoped, tag = 'output window, operand 0']
    %7 = vsyncpa [#allocation3], 0
    %s8 = scalar_lea.sflag [#allocation3], 1
    %9 = vsyncpa %s8, 0
    loop: start=0, step=1, limit=4
    $region2: #{sh_forward_packed.1} parent=1 // loop_pre_header
      _
    $region3: #{sh_forward_packed.1} parent=1 // loop_header
      %s11 = sphi 0, %s15
      %p12 = scmp.ge.s32.totalorder %s11, 4
      %s21 = sphi 0, %s23
      %s24 = sphi 0, %s21
      %s25 = sphi 0, %s24
      %s41 = sphi 0, %s25
      %s47 = sphi 0, %s49
      %s50 = sphi 0, %s47
      %s51 = sphi 0, %s50
      %s67 = sphi 0, %s51
      %s73 = sphi 0, %s75
      %s76 = sphi 0, %s73
      %s77 = sphi 0, %s76
      %s93 = sphi 0, %s77
    $region4: #{sh_forward_packed.1} parent=1 // loop_header_branch
      %14 = sbr.rel (%p12) target = $region8
    $region5: #{sh_forward_packed.1} parent=1 // loop_body
      %s16 = ssub.s32 %s11, 1
      %s17 = ssub.s32 %s11, 2
      %s18 = sadd.s32 %s11, 1
      %s19 = ssub.s32 %s11, %s18
      %p20 = scmp.eq.s32.totalorder %s19, 0
      %s22 = sadd.s32 %s21, 1
      %s23 = scalar_select %p20, %s21, %s22
      %p26 = pneg %p20
      %p27 = scmp.eq.s32.totalorder %s11, 1
      %p28 = por %p26, %p27
      %p29 = scmp.ne.s32.totalorder %s21, %s24
      %p30 = scmp.eq.s32.totalorder %s11, 0
      %p31 = por %p29, %p30
      %p32 = scmp.ne.s32.totalorder %s21, %s24
      %p33 = scmp.eq.s32.totalorder %s16, 1
      %p34 = por %p32, %p33
      %p35 = scmp.ne.s32.totalorder %s24, %s25
      %p36 = scmp.eq.s32.totalorder %s16, 0
      %p37 = por %p35, %p36
      %p38 = scmp.ne.s32.totalorder %s24, %s25
      %p39 = scmp.eq.s32.totalorder %s17, 1
      %p40 = por %p38, %p39
      %p42 = scmp.ne.s32.totalorder %s25, %s41
      %p43 = scmp.eq.s32.totalorder %s17, 0
      %p44 = por %p42, %p43
      %s45 = ssub.s32 %s11, %s18
      %p46 = scmp.eq.s32.totalorder %s45, 0
      %s48 = sadd.s32 %s47, 1
      %s49 = scalar_select %p46, %s47, %s48
      %p52 = pneg %p46
      %p53 = scmp.eq.s32.totalorder %s11, 1
      %p54 = por %p52, %p53
      %p55 = scmp.ne.s32.totalorder %s47, %s50
      %p56 = scmp.eq.s32.totalorder %s11, 0
      %p57 = por %p55, %p56
      %p58 = scmp.ne.s32.totalorder %s47, %s50
      %p59 = scmp.eq.s32.totalorder %s16, 1
      %p60 = por %p58, %p59
      %p61 = scmp.ne.s32.totalorder %s50, %s51
      %p62 = scmp.eq.s32.totalorder %s16, 0
      %p63 = por %p61, %p62
      %p64 = scmp.ne.s32.totalorder %s50, %s51
      %p65 = scmp.eq.s32.totalorder %s17, 1
      %p66 = por %p64, %p65
      %p68 = scmp.ne.s32.totalorder %s51, %s67
      %p69 = scmp.eq.s32.totalorder %s17, 0
      %p70 = por %p68, %p69
      %s71 = ssub.s32 %s11, %s18
      %p72 = scmp.eq.s32.totalorder %s71, 0
      %s74 = sadd.s32 %s73, 1
      %s75 = scalar_select %p72, %s73, %s74
      %p78 = pneg %p72
      %p79 = scmp.eq.s32.totalorder %s11, 1
      %p80 = por %p78, %p79
      %p81 = scmp.ne.s32.totalorder %s73, %s76
      %p82 = scmp.eq.s32.totalorder %s11, 0
      %p83 = por %p81, %p82
      %p84 = scmp.ne.s32.totalorder %s73, %s76
      %p85 = scmp.eq.s32.totalorder %s16, 1
      %p86 = por %p84, %p85
      %p87 = scmp.ne.s32.totalorder %s76, %s77
      %p88 = scmp.eq.s32.totalorder %s16, 0
      %p89 = por %p87, %p88
      %p90 = scmp.ne.s32.totalorder %s76, %s77
      %p91 = scmp.eq.s32.totalorder %s17, 1
      %p92 = por %p90, %p91
      %p94 = scmp.ne.s32.totalorder %s77, %s93
      %p95 = scmp.eq.s32.totalorder %s17, 0
      %p96 = por %p94, %p95
      %p97 = scmp.le.s32.totalorder 1, %s11
      %p98 = scmp.lt.s32.totalorder %s11, 3
      %p99 = pnand %p97, %p98
      %p100 = pneg %p99
      // Predicated region
      $region9: #{sh_forward_packed.1} parent=5 // pred_check
        _
      $region10: #{sh_forward_packed.1} parent=5 // pred_check_branch
        %102 = sbr.rel (%p99) target = $region12
      $region11: #{sh_forward_packed.1} parent=5 // pred_region
        %s103 = ssub.s32 %s11, 1
      $region12: #{sh_forward_packed.1} parent=5 // pred_fallthru
        _
      %p104 = scmp.lt.s32.totalorder %s11, 2
      // Predicated region
      $region13: #{sh_forward_packed.1} parent=5 // pred_check
        %p105 = pneg %p104
      $region14: #{sh_forward_packed.1} parent=5 // pred_check_branch
        %107 = sbr.rel (%p105) target = $region16
      $region15: #{sh_forward_packed.1} parent=5 // pred_region
        // Predicated region
        $region17: #{sh_forward_packed.1} parent=15 // pred_check
          %p108 = pneg %p31
        $region18: #{sh_forward_packed.1} parent=15 // pred_check_branch
          %110 = sbr.rel (%p108) target = $region20
        $region19: #{sh_forward_packed.1} parent=15 // pred_region
          %s111 = sand.u32 %s21, 1
          %s112 = scalar_lea.sflag [#allocation3], %s111
          %s113 = sand.u32 %s21, 1
          %s114 = smul.addr %s113, 216
          %s115 = scalar_lea.vmem [#allocation2], %s114
          %117 = vsyncadd %s112, 0
          %s118 = smul.addr %s11, 8
          %s119 = scalar_lea.hbm %s0, %s118
          %s120 = sshll.u32 %s119, 4
          %s121 = int_to_ptr.hbm [resolvable:$true] %s120
          %s122 = sshll.u32 %s115, 4
          %s123 = int_to_ptr.vmem [resolvable:$true] %s122
          %128 = dma.hbm_to_vmem [thread:$0]  %s121, 3456, %s123, %s112, 256, 128, 8
        $region20: #{sh_forward_packed.1} parent=15 // pred_fallthru
          _
        // Predicated region
        $region21: #{sh_forward_packed.1} parent=15 // pred_check
          %p129 = pneg %p57
        $region22: #{sh_forward_packed.1} parent=15 // pred_check_branch
          %131 = sbr.rel (%p129) target = $region24
        $region23: #{sh_forward_packed.1} parent=15 // pred_region
          %s132 = sand.u32 %s47, 1
          %s133 = sand.u32 %s47, 1
          %s134 = smul.addr %s133, 24
          %s135 = scalar_lea.vmem [#allocation4], %s134
          %s136 = smul.addr %s11, 8
          %s137 = scalar_lea.vmem %s1, %s136
          // Predicated region
          $region25: #{sh_forward_packed.1} parent=23 // pred_check
            _
          $region26: #{sh_forward_packed.1} parent=23 // pred_check_branch
            %139 = sbr.rel (0) target = $region28
          $region27: #{sh_forward_packed.1} parent=23 // pred_region
            // Predicated region
            $region29: #{sh_forward_packed.1} parent=27 // pred_check
              _
            $region30: #{sh_forward_packed.1} parent=27 // pred_check_branch
              %141 = sbr.rel (0) target = $region32
            $region31: #{sh_forward_packed.1} parent=27 // pred_region
              // Predicated region
              $region44: #{sh_forward_packed.1} parent=31 // pred_check
                _
              $region45: #{sh_forward_packed.1} parent=31 // pred_check_branch
                %161 = sbr.rel (0) target = $region47
              $region46: #{sh_forward_packed.1} parent=31 // pred_region
                loop: start=0, step=1, limit=1
                $region48: #{sh_forward_packed.1} parent=46 // loop_pre_header
                  _
                $region49: #{sh_forward_packed.1} parent=46 // loop_header
                  %s163 = sphi 0, %s167
                  %p164 = scmp.ge.s32.totalorder %s163, 1
                  %s168 = sphi %s137, %s137
                  %s169 = sphi %s135, %s135
                $region50: #{sh_forward_packed.1} parent=46 // loop_header_branch
                  %166 = sbr.rel (%p164) target = $region54
                $region51: #{sh_forward_packed.1} parent=46 // loop_body
                  %v170 = vld [vmem:[%s168] sm:$0xff]
                  %171 = vst [vmem:[%s169] sm:$0xff] %v170
                  %v172 = vld [vmem:[%s168 + $0x10] sm:$0xff]
                  %173 = vst [vmem:[%s169 + $0x8] sm:$0xff] %v172
                  %v174 = vld [vmem:[%s168 + $0x20] sm:$0xff]
                  %175 = vst [vmem:[%s169 + $0x10] sm:$0xff] %v174
                $region52: #{sh_forward_packed.1} parent=46 // loop_footer
                  %s167 = sadd.s32 1, %s163
                $region53: #{sh_forward_packed.1} parent=46 // loop_footer_branch
                  %162 = sbr.rel target = $region49
                $region54: #{sh_forward_packed.1} parent=46 // loop_exit
                  _
              $region47: #{sh_forward_packed.1} parent=31 // pred_fallthru
                _
              // Predicated region
              $region55: #{sh_forward_packed.1} parent=31 // pred_check
                _
              $region56: #{sh_forward_packed.1} parent=31 // pred_check_branch
                %177 = sbr.rel target = $region58
              $region57: #{sh_forward_packed.1} parent=31 // pred_region
                _
              $region58: #{sh_forward_packed.1} parent=31 // pred_fallthru
                _
            $region32: #{sh_forward_packed.1} parent=27 // pred_fallthru
              _
            // Predicated region
            $region33: #{sh_forward_packed.1} parent=27 // pred_check
              _
            $region34: #{sh_forward_packed.1} parent=27 // pred_check_branch
              %143 = sbr.rel target = $region36
            $region35: #{sh_forward_packed.1} parent=27 // pred_region
              %s145 = ssub.s32 256, 1
              loop: start=0, step=1, limit=1
              $region37: #{sh_forward_packed.1} parent=35 // loop_pre_header
                _
              $region38: #{sh_forward_packed.1} parent=35 // loop_header
                %s147 = sphi 0, %s151
                %p148 = scmp.ge.s32.totalorder %s147, 1
                %s152 = sphi %s137, %s137
                %s153 = sphi %s135, %s135
              $region39: #{sh_forward_packed.1} parent=35 // loop_header_branch
                %150 = sbr.rel (%p148) target = $region43
              $region40: #{sh_forward_packed.1} parent=35 // loop_body
                %v154 = vld [vmem:[%s152] sm:%s145]
                %155 = vst [vmem:[%s153] sm:%s145] %v154
                %v156 = vld [vmem:[%s152 + $0x10] sm:%s145]
                %157 = vst [vmem:[%s153 + $0x8] sm:%s145] %v156
                %v158 = vld [vmem:[%s152 + $0x20] sm:%s145]
                %159 = vst [vmem:[%s153 + $0x10] sm:%s145] %v158
              $region41: #{sh_forward_packed.1} parent=35 // loop_footer
                %s151 = sadd.s32 1, %s147
              $region42: #{sh_forward_packed.1} parent=35 // loop_footer_branch
                %146 = sbr.rel target = $region38
              $region43: #{sh_forward_packed.1} parent=35 // loop_exit
                _
            $region36: #{sh_forward_packed.1} parent=27 // pred_fallthru
              _
          $region28: #{sh_forward_packed.1} parent=23 // pred_fallthru
            _
          %178 = vnop
        $region24: #{sh_forward_packed.1} parent=15 // pred_fallthru
          _
      $region16: #{sh_forward_packed.1} parent=5 // pred_fallthru
        _
      %p179 = scmp.le.s32.totalorder 1, %s11
      %p180 = scmp.lt.s32.totalorder %s11, 3
      %p181 = pnand %p179, %p180
      %p182 = pneg %p181
      // Predicated region
      $region59: #{sh_forward_packed.1} parent=5 // pred_check
        _
      $region60: #{sh_forward_packed.1} parent=5 // pred_check_branch
        %184 = sbr.rel (%p181) target = $region62
      $region61: #{sh_forward_packed.1} parent=5 // pred_region
        %s185 = ssub.s32 %s11, 1
        %s186 = sand.u32 %s24, 1
        %s187 = scalar_lea.sflag [#allocation3], %s186
        %s188 = sand.u32 %s24, 1
        %s189 = smul.addr %s188, 216
        %s190 = scalar_lea.vmem [#allocation2], %s189
        // Predicated region
        $region63: #{sh_forward_packed.1} parent=61 // pred_check
          %p191 = pneg %p37
        $region64: #{sh_forward_packed.1} parent=61 // pred_check_branch
          %193 = sbr.rel (%p191) target = $region66
        $region65: #{sh_forward_packed.1} parent=61 // pred_region
          %195 = dma.done %s187, 3456
        $region66: #{sh_forward_packed.1} parent=61 // pred_fallthru
          _
        %s196 = sand.u32 %s50, 1
        %s197 = sand.u32 %s50, 1
        %s198 = smul.addr %s197, 24
        %s199 = scalar_lea.vmem [#allocation4], %s198
        // Predicated region
        $region67: #{sh_forward_packed.1} parent=61 // pred_check
          %p200 = pneg %p63
        $region68: #{sh_forward_packed.1} parent=61 // pred_check_branch
          %202 = sbr.rel (%p200) target = $region70
        $region69: #{sh_forward_packed.1} parent=61 // pred_region
          _
        $region70: #{sh_forward_packed.1} parent=61 // pred_fallthru
          _
        %s203 = sand.u32 %s24, 1
        %s204 = scalar_lea.sflag [#allocation3], %s203
        %s205 = sand.u32 %s24, 1
        %s206 = smul.addr %s205, 216
        %s207 = scalar_lea.vmem [#allocation2], %s206
        %p208 = pneg %p37
        %p209 = pneg %p34
        %s210 = sand.u32 %s50, 1
        %s211 = sand.u32 %s50, 1
        %s212 = smul.addr %s211, 24
        %s213 = scalar_lea.vmem [#allocation4], %s212
        %p214 = pneg %p63
        %p215 = pneg %p60
        %p216 = pneg %p89
        %p217 = pneg %p86
        %s218 = sand.u32 %s76, 1
        %s219 = sand.u32 %s76, 1
        %s220 = smul.addr %s219, 24
        %s221 = scalar_lea.vmem [#allocation5], %s220
        %v222 = vld [vmem:[%s199] sm:$0xff]
        %s223 = scalar_lea.vmem %s199, 8 [#allocation4]
        %v224 = vld [vmem:[%s223] sm:$0xff]
        %s225 = scalar_lea.vmem %s199, 16 [#allocation4]
        %v226 = vld [vmem:[%s225] sm:$0xff]
        %v227 = vmul.f32 %v222, %v222
        %v228 = vmul.f32 %v224, %v224
        %v229 = vmul.f32 %v226, %v226
        %v230 = vmul.f32 %v224, -0.48860252
        %v231 = vmul.f32 %v226, 0.48860252
        %v232 = vmul.f32 %v222, -0.48860252
        %v233 = vmul.f32 %v222, %v224
        %v234 = vmul.f32 %v233, 1.0925485
        %v235 = vmul.f32 %v224, %v226
        %v236 = vmul.f32 %v235, -1.0925485
        %v237 = vmul.f32 %v229, 2.0
        %v238 = vsub.f32 %v237, %v227
        %v239 = vsub.f32 %v238, %v228
        %v240 = vmul.f32 %v239, 0.31539157
        %v241 = vmul.f32 %v222, %v226
        %v242 = vmul.f32 %v241, -1.0925485
        %v243 = vsub.f32 %v227, %v228
        %v244 = vmul.f32 %v243, 0.54627424
        %v245 = vld [vmem:[%s190] sm:$0xff]
        %v246 = vmul.f32 %v245, 0.2820948
        %s247 = scalar_lea.vmem %s190, 8 [#allocation2]
        %v248 = vld [vmem:[%s247] sm:$0xff]
        %v249 = vmul.f32 %v230, %v248
        %v250 = vadd.f32 %v246, %v249
        %s251 = scalar_lea.vmem %s190, 16 [#allocation2]
        %v252 = vld [vmem:[%s251] sm:$0xff]
        %v253 = vmul.f32 %v231, %v252
        %v254 = vadd.f32 %v250, %v253
        %s255 = scalar_lea.vmem %s190, 24 [#allocation2]
        %v256 = vld [vmem:[%s255] sm:$0xff]
        %v257 = vmul.f32 %v232, %v256
        %v258 = vadd.f32 %v254, %v257
        %s259 = scalar_lea.vmem %s190, 32 [#allocation2]
        %v260 = vld [vmem:[%s259] sm:$0xff]
        %v261 = vmul.f32 %v234, %v260
        %v262 = vadd.f32 %v258, %v261
        %s263 = scalar_lea.vmem %s190, 40 [#allocation2]
        %v264 = vld [vmem:[%s263] sm:$0xff]
        %v265 = vmul.f32 %v236, %v264
        %v266 = vadd.f32 %v262, %v265
        %s267 = scalar_lea.vmem %s190, 48 [#allocation2]
        %v268 = vld [vmem:[%s267] sm:$0xff]
        %v269 = vmul.f32 %v240, %v268
        %v270 = vadd.f32 %v266, %v269
        %s271 = scalar_lea.vmem %s190, 56 [#allocation2]
        %v272 = vld [vmem:[%s271] sm:$0xff]
        %v273 = vmul.f32 %v242, %v272
        %v274 = vadd.f32 %v270, %v273
        %s275 = scalar_lea.vmem %s190, 64 [#allocation2]
        %v276 = vld [vmem:[%s275] sm:$0xff]
        %v277 = vmul.f32 %v244, %v276
        %v278 = vadd.f32 %v274, %v277
        %279 = vst [vmem:[%s221] sm:$0xff] %v278
        %s280 = scalar_lea.vmem %s190, 72 [#allocation2]
        %v281 = vld [vmem:[%s280] sm:$0xff]
        %v282 = vmul.f32 %v281, 0.2820948
        %s283 = scalar_lea.vmem %s190, 80 [#allocation2]
        %v284 = vld [vmem:[%s283] sm:$0xff]
        %v285 = vmul.f32 %v230, %v284
        %v286 = vadd.f32 %v282, %v285
        %s287 = scalar_lea.vmem %s190, 88 [#allocation2]
        %v288 = vld [vmem:[%s287] sm:$0xff]
        %v289 = vmul.f32 %v231, %v288
        %v290 = vadd.f32 %v286, %v289
        %s291 = scalar_lea.vmem %s190, 96 [#allocation2]
        %v292 = vld [vmem:[%s291] sm:$0xff]
        %v293 = vmul.f32 %v232, %v292
        %v294 = vadd.f32 %v290, %v293
        %s295 = scalar_lea.vmem %s190, 104 [#allocation2]
        %v296 = vld [vmem:[%s295] sm:$0xff]
        %v297 = vmul.f32 %v234, %v296
        %v298 = vadd.f32 %v294, %v297
        %s299 = scalar_lea.vmem %s190, 112 [#allocation2]
        %v300 = vld [vmem:[%s299] sm:$0xff]
        %v301 = vmul.f32 %v236, %v300
        %v302 = vadd.f32 %v298, %v301
        %s303 = scalar_lea.vmem %s190, 120 [#allocation2]
        %v304 = vld [vmem:[%s303] sm:$0xff]
        %v305 = vmul.f32 %v240, %v304
        %v306 = vadd.f32 %v302, %v305
        %s307 = scalar_lea.vmem %s190, 128 [#allocation2]
        %v308 = vld [vmem:[%s307] sm:$0xff]
        %v309 = vmul.f32 %v242, %v308
        %v310 = vadd.f32 %v306, %v309
        %s311 = scalar_lea.vmem %s190, 136 [#allocation2]
        %v312 = vld [vmem:[%s311] sm:$0xff]
        %v313 = vmul.f32 %v244, %v312
        %v314 = vadd.f32 %v310, %v313
        %s315 = scalar_lea.vmem %s221, 8 [#allocation5]
        %316 = vst [vmem:[%s315] sm:$0xff] %v314
        %s317 = scalar_lea.vmem %s190, 144 [#allocation2]
        %v318 = vld [vmem:[%s317] sm:$0xff]
        %v319 = vmul.f32 %v318, 0.2820948
        %s320 = scalar_lea.vmem %s190, 152 [#allocation2]
        %v321 = vld [vmem:[%s320] sm:$0xff]
        %v322 = vmul.f32 %v230, %v321
        %v323 = vadd.f32 %v319, %v322
        %s324 = scalar_lea.vmem %s190, 160 [#allocation2]
        %v325 = vld [vmem:[%s324] sm:$0xff]
        %v326 = vmul.f32 %v231, %v325
        %v327 = vadd.f32 %v323, %v326
        %s328 = scalar_lea.vmem %s190, 168 [#allocation2]
        %v329 = vld [vmem:[%s328] sm:$0xff]
        %v330 = vmul.f32 %v232, %v329
        %v331 = vadd.f32 %v327, %v330
        %s332 = scalar_lea.vmem %s190, 176 [#allocation2]
        %v333 = vld [vmem:[%s332] sm:$0xff]
        %v334 = vmul.f32 %v234, %v333
        %v335 = vadd.f32 %v331, %v334
        %s336 = scalar_lea.vmem %s190, 184 [#allocation2]
        %v337 = vld [vmem:[%s336] sm:$0xff]
        %v338 = vmul.f32 %v236, %v337
        %v339 = vadd.f32 %v335, %v338
        %s340 = scalar_lea.vmem %s190, 192 [#allocation2]
        %v341 = vld [vmem:[%s340] sm:$0xff]
        %v342 = vmul.f32 %v240, %v341
        %v343 = vadd.f32 %v339, %v342
        %s344 = scalar_lea.vmem %s190, 200 [#allocation2]
        %v345 = vld [vmem:[%s344] sm:$0xff]
        %v346 = vmul.f32 %v242, %v345
        %v347 = vadd.f32 %v343, %v346
        %s348 = scalar_lea.vmem %s190, 208 [#allocation2]
        %v349 = vld [vmem:[%s348] sm:$0xff]
        %v350 = vmul.f32 %v244, %v349
        %v351 = vadd.f32 %v347, %v350
        %s352 = scalar_lea.vmem %s221, 16 [#allocation5]
        %353 = vst [vmem:[%s352] sm:$0xff] %v351
        %s354 = sand.u32 %s76, 1
        %s355 = sand.u32 %s76, 1
        %s356 = smul.addr %s355, 24
        %s357 = scalar_lea.vmem [#allocation5], %s356
        // Predicated region
        $region71: #{sh_forward_packed.1} parent=61 // pred_check
          %p358 = pneg %p86
        $region72: #{sh_forward_packed.1} parent=61 // pred_check_branch
          %360 = sbr.rel (%p358) target = $region74
        $region73: #{sh_forward_packed.1} parent=61 // pred_region
          %s361 = smul.addr %s16, 8
          %s362 = scalar_lea.vmem %s2, %s361
          // Predicated region
          $region75: #{sh_forward_packed.1} parent=73 // pred_check
            _
          $region76: #{sh_forward_packed.1} parent=73 // pred_check_branch
            %364 = sbr.rel (0) target = $region78
          $region77: #{sh_forward_packed.1} parent=73 // pred_region
            // Predicated region
            $region79: #{sh_forward_packed.1} parent=77 // pred_check
              _
            $region80: #{sh_forward_packed.1} parent=77 // pred_check_branch
              %366 = sbr.rel (0) target = $region82
            $region81: #{sh_forward_packed.1} parent=77 // pred_region
              // Predicated region
              $region94: #{sh_forward_packed.1} parent=81 // pred_check
                _
              $region95: #{sh_forward_packed.1} parent=81 // pred_check_branch
                %386 = sbr.rel (0) target = $region97
              $region96: #{sh_forward_packed.1} parent=81 // pred_region
                loop: start=0, step=1, limit=1
                $region98: #{sh_forward_packed.1} parent=96 // loop_pre_header
                  _
                $region99: #{sh_forward_packed.1} parent=96 // loop_header
                  %s388 = sphi 0, %s392
                  %p389 = scmp.ge.s32.totalorder %s388, 1
                  %s393 = sphi %s357, %s357
                  %s394 = sphi %s362, %s362
                $region100: #{sh_forward_packed.1} parent=96 // loop_header_branch
                  %391 = sbr.rel (%p389) target = $region104
                $region101: #{sh_forward_packed.1} parent=96 // loop_body
                  %v395 = vld [vmem:[%s393] sm:$0xff]
                  %396 = vst [vmem:[%s394] sm:$0xff] %v395
                  %v397 = vld [vmem:[%s393 + $0x8] sm:$0xff]
                  %398 = vst [vmem:[%s394 + $0x10] sm:$0xff] %v397
                  %v399 = vld [vmem:[%s393 + $0x10] sm:$0xff]
                  %400 = vst [vmem:[%s394 + $0x20] sm:$0xff] %v399
                $region102: #{sh_forward_packed.1} parent=96 // loop_footer
                  %s392 = sadd.s32 1, %s388
                $region103: #{sh_forward_packed.1} parent=96 // loop_footer_branch
                  %387 = sbr.rel target = $region99
                $region104: #{sh_forward_packed.1} parent=96 // loop_exit
                  _
              $region97: #{sh_forward_packed.1} parent=81 // pred_fallthru
                _
              // Predicated region
              $region105: #{sh_forward_packed.1} parent=81 // pred_check
                _
              $region106: #{sh_forward_packed.1} parent=81 // pred_check_branch
                %402 = sbr.rel target = $region108
              $region107: #{sh_forward_packed.1} parent=81 // pred_region
                _
              $region108: #{sh_forward_packed.1} parent=81 // pred_fallthru
                _
            $region82: #{sh_forward_packed.1} parent=77 // pred_fallthru
              _
            // Predicated region
            $region83: #{sh_forward_packed.1} parent=77 // pred_check
              _
            $region84: #{sh_forward_packed.1} parent=77 // pred_check_branch
              %368 = sbr.rel target = $region86
            $region85: #{sh_forward_packed.1} parent=77 // pred_region
              %s370 = ssub.s32 256, 1
              loop: start=0, step=1, limit=1
              $region87: #{sh_forward_packed.1} parent=85 // loop_pre_header
                _
              $region88: #{sh_forward_packed.1} parent=85 // loop_header
                %s372 = sphi 0, %s376
                %p373 = scmp.ge.s32.totalorder %s372, 1
                %s377 = sphi %s357, %s357
                %s378 = sphi %s362, %s362
              $region89: #{sh_forward_packed.1} parent=85 // loop_header_branch
                %375 = sbr.rel (%p373) target = $region93
              $region90: #{sh_forward_packed.1} parent=85 // loop_body
                %v379 = vld [vmem:[%s377] sm:%s370]
                %380 = vst [vmem:[%s378] sm:%s370] %v379
                %v381 = vld [vmem:[%s377 + $0x8] sm:%s370]
                %382 = vst [vmem:[%s378 + $0x10] sm:%s370] %v381
                %v383 = vld [vmem:[%s377 + $0x10] sm:%s370]
                %384 = vst [vmem:[%s378 + $0x20] sm:%s370] %v383
              $region91: #{sh_forward_packed.1} parent=85 // loop_footer
                %s376 = sadd.s32 1, %s372
              $region92: #{sh_forward_packed.1} parent=85 // loop_footer_branch
                %371 = sbr.rel target = $region88
              $region93: #{sh_forward_packed.1} parent=85 // loop_exit
                _
            $region86: #{sh_forward_packed.1} parent=77 // pred_fallthru
              _
          $region78: #{sh_forward_packed.1} parent=73 // pred_fallthru
            _
          %403 = vnop
        $region74: #{sh_forward_packed.1} parent=61 // pred_fallthru
          _
      $region62: #{sh_forward_packed.1} parent=5 // pred_fallthru
        _
      %p404 = scmp.le.s32.totalorder 2, %s11
      // Predicated region
      $region109: #{sh_forward_packed.1} parent=5 // pred_check
        %p405 = pneg %p404
      $region110: #{sh_forward_packed.1} parent=5 // pred_check_branch
        %407 = sbr.rel (%p405) target = $region112
      $region111: #{sh_forward_packed.1} parent=5 // pred_region
        %s408 = ssub.s32 %s11, 2
        // Predicated region
        $region113: #{sh_forward_packed.1} parent=111 // pred_check
          %p409 = pneg %p92
        $region114: #{sh_forward_packed.1} parent=111 // pred_check_branch
          %411 = sbr.rel (%p409) target = $region116
        $region115: #{sh_forward_packed.1} parent=111 // pred_region
          %s412 = sand.u32 %s77, 1
          %s413 = sand.u32 %s77, 1
          %s414 = smul.addr %s413, 24
          %s415 = scalar_lea.vmem [#allocation5], %s414
        $region116: #{sh_forward_packed.1} parent=111 // pred_fallthru
          _
      $region112: #{sh_forward_packed.1} parent=5 // pred_fallthru
        _
    $region6: #{sh_forward_packed.1} parent=1 // loop_footer
      %s15 = sadd.s32 1, %s11
    $region7: #{sh_forward_packed.1} parent=1 // loop_footer_branch
      %10 = sbr.rel target = $region3
    $region8: #{sh_forward_packed.1} parent=1 // loop_exit
      _
    %416 = vsyncpa [#allocation3], 1
    %s417 = scalar_lea.sflag [#allocation3], 1
    %418 = vsyncpa %s417, 1

</llo_original>
